<compile_context>
chip_gen: v6e
topology: v6e:2x2x1
jax: 0.10.0
libtpu: 0.0.40
codegen_flags: <defaults>
</compile_context>

<pallas_src>
import jax
import jax.numpy as jnp
from jax.experimental import pallas as pl
from jax.experimental.pallas import tpu as pltpu

NUM_FREQUENCIES = 2
IN_FEATURES = 2 * NUM_FREQUENCIES  # 4
OUT_FEATURES = 1

_MAX_TILE_N = 131072   # lanes per grid step; ~16 MiB VMEM double-buffered (v7x-safe)
_MIN_PALLAS_N = 32768  # below this, XLA-fused matvec beats launch + layout glue


def _linear_kernel(w_ref, b_ref, x_ref, o_ref):
    """One lane-dense tile of  out = w . x + b  computed on the VPU.

    w_ref: SMEM (IN_FEATURES,) f32      b_ref: SMEM (1,) f32
    x_ref: VMEM (IN_FEATURES, TILE_N)   o_ref: VMEM (1, TILE_N)

    NOTE: on the (masked) last grid step the tail lanes past N hold garbage;
    they are never reduced over and the masked tail store discards them, so
    relying on Pallas partial-block handling (instead of jnp.pad) is safe.
    """
    acc = x_ref[0, :] * w_ref[0] + b_ref[0]        # bias folded into init
    for i in range(1, IN_FEATURES):                # unrolled: 4 FMAs per vreg
        acc = acc + x_ref[i, :] * w_ref[i]
    o_ref[0, :] = acc


def net_forward_pallas(x_fm: jax.Array, weight: jax.Array, bias: jax.Array,
                       *, max_tile_n: int = _MAX_TILE_N) -> jax.Array:
    """Pallas path.  x_fm is FEATURE-MAJOR: (IN_FEATURES, N) f32 (i.e. x.T).

    weight: (1, IN_FEATURES) (PyTorch (out, in) convention), bias: (1,).
    Returns (N,) (scalar if N == 1, matching torch .squeeze()).
    """
    k, n = x_fm.shape
    assert k == IN_FEATURES
    x_fm = x_fm.astype(jnp.float32)
    w = weight.reshape(IN_FEATURES).astype(jnp.float32)
    b = bias.reshape(OUT_FEATURES).astype(jnp.float32)

    # Lane-dense tiles over the batch axis.  Keep the grid >= 2 steps when
    # possible (v7x megacore sharding) and cap tile size for VMEM headroom.
    tile_n = min(max_tile_n, max(128, pl.cdiv(n, 2 * 128) * 128))
    grid_n = pl.cdiv(n, tile_n)   # no jnp.pad: Pallas masks the partial tail block

    out = pl.pallas_call(
        _linear_kernel,
        out_shape=jax.ShapeDtypeStruct((OUT_FEATURES, n), jnp.float32),
        grid=(grid_n,),
        in_specs=[
            pl.BlockSpec(memory_space=pltpu.MemorySpace.SMEM),   # 4 weight scalars
            pl.BlockSpec(memory_space=pltpu.MemorySpace.SMEM),   # bias scalar
            pl.BlockSpec((IN_FEATURES, tile_n), lambda i: (0, i)),
        ],
        out_specs=pl.BlockSpec((OUT_FEATURES, tile_n), lambda i: (0, i)),
        compiler_params=pltpu.CompilerParams(
            dimension_semantics=("parallel",)),
        cost_estimate=pl.CostEstimate(
            flops=2 * IN_FEATURES * n,
            transcendentals=0,
            bytes_accessed=(IN_FEATURES + OUT_FEATURES) * n * 4),
    )(w, b, x_fm)

    y = out[0, :]                 # (N,)  == Flatten((N, 1))
    return y.squeeze()            # matches torch .squeeze(): scalar iff N == 1


def net_forward(x: jax.Array, weight: jax.Array, bias: jax.Array) -> jax.Array:
    """PyTorch-layout entry: x is (N, IN_FEATURES).

    Small/medium batches use the XLA-fused matvec (kernel launch + layout glue
    dominate there).  Large batches use the Pallas kernel.  Callers that can
    produce feature-major activations should call `net_forward_pallas` directly
    and skip the transpose copy entirely.
    """
    n = x.shape[0]
    if n < _MIN_PALLAS_N:
        y = (x.astype(jnp.float32) @ weight.astype(jnp.float32).T
             + bias.astype(jnp.float32)).reshape(-1)
        return y.squeeze()
    # TODO(synk): if the producer can emit feature-major activations, drop this
    # transpose — it is the only extra HBM copy left on this path.
    return net_forward_pallas(x.T, weight, bias)


if __name__ == "__main__":
    key = jax.random.PRNGKey(0)
    k_x, k_w, k_b = jax.random.split(key, 3)

    # Batch consistent with the module's setup (2000 sample points, 4 Fourier feats).
    N = 2000
    x = jax.random.normal(k_x, (N, IN_FEATURES), dtype=jnp.float32)

    # Deterministic init matching nn.Linear's U(-1/sqrt(fan_in), 1/sqrt(fan_in)).
    bound = 1.0 / float(IN_FEATURES) ** 0.5
    weight = jax.random.uniform(k_w, (OUT_FEATURES, IN_FEATURES),
                                minval=-bound, maxval=bound, dtype=jnp.float32)
    bias = jax.random.uniform(k_b, (OUT_FEATURES,),
                              minval=-bound, maxval=bound, dtype=jnp.float32)

    # Plain-JAX reference of the PyTorch semantics.
    y_ref = (x @ weight.T + bias).reshape(N, OUT_FEATURES).squeeze()

    # Feature-major input for the Pallas path (test glue only).
    x_fm = x.T

    # Small tile -> 4-step grid with a masked tail block (2000 % 512 != 0).
    y = jax.block_until_ready(
        net_forward_pallas(x_fm, weight, bias, max_tile_n=512))
    assert y.shape == (N,), y.shape
    assert jnp.allclose(y, y_ref, atol=1e-5, rtol=1e-5)

    # Default tiling (tile_n = 1024 here -> 2-step grid, masked tail, no pad).
    y2 = jax.block_until_ready(net_forward_pallas(x_fm, weight, bias))
    assert jnp.allclose(y2, y_ref, atol=1e-5, rtol=1e-5)

    # Dispatcher sanity: N=2000 < _MIN_PALLAS_N, takes the XLA matvec path.
    y3 = jax.block_until_ready(net_forward(x, weight, bias))
    assert jnp.allclose(y3, y_ref, atol=1e-5, rtol=1e-5)

    print("KERNEL_OK")
</pallas_src>

<mosaic_0001>
module attributes {stable_mosaic.version = 11 : i64} {
  func.func @_linear_kernel(%arg0: i32, %arg1: memref<4xf32, #tpu.memory_space<smem>>, %arg2: memref<1xf32, #tpu.memory_space<smem>>, %arg3: memref<4x512xf32, #tpu.memory_space<vmem>>, %arg4: memref<1x512xf32, #tpu.memory_space<vmem>>) attributes {dimension_semantics = [#tpu.dimension_semantics<parallel>], iteration_bounds = array<i64: 4>, scalar_prefetch = 0 : i64, scratch_operands = 0 : i64, tpu.core_type = #tpu.core_type<tc>, window_params = [{transform_indices = @transform_0, window_bounds = array<i64: 4>}, {transform_indices = @transform_1, window_bounds = array<i64: 1>}, {transform_indices = @transform_2, window_bounds = array<i64: 4, 512>}, {transform_indices = @transform_3, window_bounds = array<i64: 1, 512>}]} {
    %c0 = arith.constant 0 : index
    %c0_0 = arith.constant 0 : index
    %0 = vector.load %arg3[%c0, %c0_0] : memref<4x512xf32, #tpu.memory_space<vmem>>, vector<1x512xf32>
    %1 = vector.shape_cast %0 : vector<1x512xf32> to vector<512xf32>
    %c0_1 = arith.constant 0 : index
    %2 = memref.load %arg1[%c0_1] : memref<4xf32, #tpu.memory_space<smem>>
    %3 = vector.broadcast %2 : f32 to vector<512xf32>
    %4 = arith.mulf %1, %3 : vector<512xf32>
    %c0_2 = arith.constant 0 : index
    %5 = memref.load %arg2[%c0_2] : memref<1xf32, #tpu.memory_space<smem>>
    %6 = vector.broadcast %5 : f32 to vector<512xf32>
    %7 = arith.addf %4, %6 : vector<512xf32>
    %c1 = arith.constant 1 : index
    %c0_3 = arith.constant 0 : index
    %8 = vector.load %arg3[%c1, %c0_3] : memref<4x512xf32, #tpu.memory_space<vmem>>, vector<1x512xf32>
    %9 = vector.shape_cast %8 : vector<1x512xf32> to vector<512xf32>
    %c1_4 = arith.constant 1 : index
    %10 = memref.load %arg1[%c1_4] : memref<4xf32, #tpu.memory_space<smem>>
    %11 = vector.broadcast %10 : f32 to vector<512xf32>
    %12 = arith.mulf %9, %11 : vector<512xf32>
    %13 = arith.addf %7, %12 : vector<512xf32>
    %c2 = arith.constant 2 : index
    %c0_5 = arith.constant 0 : index
    %14 = vector.load %arg3[%c2, %c0_5] : memref<4x512xf32, #tpu.memory_space<vmem>>, vector<1x512xf32>
    %15 = vector.shape_cast %14 : vector<1x512xf32> to vector<512xf32>
    %c2_6 = arith.constant 2 : index
    %16 = memref.load %arg1[%c2_6] : memref<4xf32, #tpu.memory_space<smem>>
    %17 = vector.broadcast %16 : f32 to vector<512xf32>
    %18 = arith.mulf %15, %17 : vector<512xf32>
    %19 = arith.addf %13, %18 : vector<512xf32>
    %c3 = arith.constant 3 : index
    %c0_7 = arith.constant 0 : index
    %20 = vector.load %arg3[%c3, %c0_7] : memref<4x512xf32, #tpu.memory_space<vmem>>, vector<1x512xf32>
    %21 = vector.shape_cast %20 : vector<1x512xf32> to vector<512xf32>
    %c3_8 = arith.constant 3 : index
    %22 = memref.load %arg1[%c3_8] : memref<4xf32, #tpu.memory_space<smem>>
    %23 = vector.broadcast %22 : f32 to vector<512xf32>
    %24 = arith.mulf %21, %23 : vector<512xf32>
    %25 = arith.addf %19, %24 : vector<512xf32>
    %c0_9 = arith.constant 0 : index
    %c0_10 = arith.constant 0 : index
    %26 = vector.load %arg4[%c0_9, %c0_10] : memref<1x512xf32, #tpu.memory_space<vmem>>, vector<1x512xf32>
    %27 = vector.shape_cast %26 : vector<1x512xf32> to vector<512xf32>
    %28 = vector.shape_cast %25 : vector<512xf32> to vector<1x512xf32>
    tpu.vector_store %arg4[%c0_9, %c0_10], %28 {strides = array<i32>} : memref<1x512xf32, #tpu.memory_space<vmem>>, vector<1x512xf32>,
    return
  }
  func.func @transform_0(%arg0: i32) -> i32 {
    %c0_i32 = arith.constant 0 : i32
    %c0_i32_0 = arith.constant 0 : i32
    return %c0_i32 : i32
  }
  func.func @transform_1(%arg0: i32) -> i32 {
    %c0_i32 = arith.constant 0 : i32
    %c0_i32_0 = arith.constant 0 : i32
    return %c0_i32 : i32
  }
  func.func @transform_2(%arg0: i32) -> (i32, i32) {
    %c0_i32 = arith.constant 0 : i32
    %c0_i32_0 = arith.constant 0 : i32
    return %c0_i32, %arg0 : i32, i32
  }
  func.func @transform_3(%arg0: i32) -> (i32, i32) {
    %c0_i32 = arith.constant 0 : i32
    %c0_i32_0 = arith.constant 0 : i32
    return %c0_i32, %arg0 : i32, i32
  }
}

</mosaic_0001>

<llo_original>
// kernel: tpu_custom_call.1
$region0: #{tpu_custom_call.1}
  #allocation0 [shape = 'u32[]', space=smem, size = 0x4, offset = 0x4, fixed_abs, tag = 'smem constant byte address 0x4 - core index']
  #allocation1 [shape = 'u32[144,128]{1,0:T(1,128)}', space=vmem, size = 0x12000, scoped, tag = 'internal scratch']
  #allocation2 [shape = 'f32[1]{0:T(128)S(6)}', space=smem, size = 0x200, scoped, tag = 'scoped memory for tpu_custom_call.1']
  %s0 = inlined_call_operand.vmem [shape: f32[4], index: 0, kind: input, shape index: {}]
  %s1 = inlined_call_operand.<no memory space> [shape: f32[1], index: 1, kind: input, shape index: {}]
  %s2 = inlined_call_operand.hbm [shape: f32[4,2000], index: 2, kind: input, shape index: {}]
  %s3 = inlined_call_operand.hbm [shape: f32[1,2000], index: 3, kind: output, shape index: {}]
  %s4 = sld [smem:[#allocation0]]
  $region53: #{tpu_custom_call.1} parent=0
    _
  %s6 = ssub.s32 1, %s4
  %s7 = scalar_select 0, %s6, %s4
  %8 = sst [smem:[#allocation2]] %s1
  $region1: #{tpu_custom_call.1} parent=0
    #allocation3 [shape = 'u8[512]{0}', space=smem, size = 0x200, scoped, tag = 'input window, operand 0, single buffered']
    #allocation4 [shape = 's32[2]{0}', space=sflag, size = 0x8, scoped, tag = 'scoped memory for tpu_custom_call.1']
    #allocation5 [shape = 's32[2]{0}', space=sflag, size = 0x8, scoped, tag = 'scoped memory for tpu_custom_call.1']
    #allocation6 [shape = 's32[2]{0}', space=sflag, size = 0x8, scoped, tag = 'scoped memory for tpu_custom_call.1']
    #allocation7 [shape = 'u8[16384]{0}', space=vmem, size = 0x4000, scoped, tag = 'input window, operand 2']
    #allocation8 [shape = 'u8[4096]{0}', space=vmem, size = 0x1000, scoped, tag = 'output window, operand 0']
    %9 = vsyncpa [#allocation6], 0
    %10 = vsyncpa [#allocation4], 0
    %s11 = scalar_lea.sflag [#allocation4], 1
    %12 = vsyncpa %s11, 0
    %13 = vsyncpa [#allocation5], 0
    %s14 = scalar_lea.sflag [#allocation5], 1
    %15 = vsyncpa %s14, 0
    loop: start=0, step=1, limit=6
    $region2: #{tpu_custom_call.1} parent=1 // loop_pre_header
      _
    $region3: #{tpu_custom_call.1} parent=1 // loop_header
      %s17 = sphi 0, %s21
      %p18 = scmp.ge.s32.totalorder %s17, 6
      %s25 = sphi 0, %s25
      %s27 = sphi 0, %s25
      %s28 = sphi 0, %s27
      %s42 = sphi 0, %s28
      %s46 = sphi 0, %s46
      %s48 = sphi 0, %s46
      %s49 = sphi 0, %s48
      %s63 = sphi 0, %s49
      %s69 = sphi 0, %s71
      %s72 = sphi 0, %s69
      %s73 = sphi 0, %s72
      %s89 = sphi 0, %s73
      %s95 = sphi 0, %s97
      %s98 = sphi 0, %s95
      %s99 = sphi 0, %s98
      %s115 = sphi 0, %s99
    $region4: #{tpu_custom_call.1} parent=1 // loop_header_branch
      %20 = sbr.rel (%p18) target = $region8
    $region5: #{tpu_custom_call.1} parent=1 // loop_body
      %s22 = ssub.s32 %s17, 1
      %s23 = ssub.s32 %s17, 2
      %s24 = sadd.s32 %s17, 1
      %s26 = sadd.s32 %s25, 1
      %p29 = scmp.eq.s32.totalorder %s17, 3
      %p30 = scmp.ne.s32.totalorder %s25, %s27
      %p31 = scmp.eq.s32.totalorder %s17, 0
      %p32 = por %p30, %p31
      %p33 = scmp.ne.s32.totalorder %s25, %s27
      %p34 = scmp.eq.s32.totalorder %s22, 3
      %p35 = por %p33, %p34
      %p36 = scmp.ne.s32.totalorder %s27, %s28
      %p37 = scmp.eq.s32.totalorder %s22, 0
      %p38 = por %p36, %p37
      %p39 = scmp.ne.s32.totalorder %s27, %s28
      %p40 = scmp.eq.s32.totalorder %s23, 3
      %p41 = por %p39, %p40
      %p43 = scmp.ne.s32.totalorder %s28, %s42
      %p44 = scmp.eq.s32.totalorder %s23, 0
      %p45 = por %p43, %p44
      %s47 = sadd.s32 %s46, 1
      %p50 = scmp.eq.s32.totalorder %s17, 3
      %p51 = scmp.ne.s32.totalorder %s46, %s48
      %p52 = scmp.eq.s32.totalorder %s17, 0
      %p53 = por %p51, %p52
      %p54 = scmp.ne.s32.totalorder %s46, %s48
      %p55 = scmp.eq.s32.totalorder %s22, 3
      %p56 = por %p54, %p55
      %p57 = scmp.ne.s32.totalorder %s48, %s49
      %p58 = scmp.eq.s32.totalorder %s22, 0
      %p59 = por %p57, %p58
      %p60 = scmp.ne.s32.totalorder %s48, %s49
      %p61 = scmp.eq.s32.totalorder %s23, 3
      %p62 = por %p60, %p61
      %p64 = scmp.ne.s32.totalorder %s49, %s63
      %p65 = scmp.eq.s32.totalorder %s23, 0
      %p66 = por %p64, %p65
      %s67 = ssub.s32 %s17, %s24
      %p68 = scmp.eq.s32.totalorder %s67, 0
      %s70 = sadd.s32 %s69, 1
      %s71 = scalar_select %p68, %s69, %s70
      %p74 = pneg %p68
      %p75 = scmp.eq.s32.totalorder %s17, 3
      %p76 = por %p74, %p75
      %p77 = scmp.ne.s32.totalorder %s69, %s72
      %p78 = scmp.eq.s32.totalorder %s17, 0
      %p79 = por %p77, %p78
      %p80 = scmp.ne.s32.totalorder %s69, %s72
      %p81 = scmp.eq.s32.totalorder %s22, 3
      %p82 = por %p80, %p81
      %p83 = scmp.ne.s32.totalorder %s72, %s73
      %p84 = scmp.eq.s32.totalorder %s22, 0
      %p85 = por %p83, %p84
      %p86 = scmp.ne.s32.totalorder %s72, %s73
      %p87 = scmp.eq.s32.totalorder %s23, 3
      %p88 = por %p86, %p87
      %p90 = scmp.ne.s32.totalorder %s73, %s89
      %p91 = scmp.eq.s32.totalorder %s23, 0
      %p92 = por %p90, %p91
      %s93 = ssub.s32 %s17, %s24
      %p94 = scmp.eq.s32.totalorder %s93, 0
      %s96 = sadd.s32 %s95, 1
      %s97 = scalar_select %p94, %s95, %s96
      %p100 = pneg %p94
      %p101 = scmp.eq.s32.totalorder %s17, 3
      %p102 = por %p100, %p101
      %p103 = scmp.ne.s32.totalorder %s95, %s98
      %p104 = scmp.eq.s32.totalorder %s17, 0
      %p105 = por %p103, %p104
      %p106 = scmp.ne.s32.totalorder %s95, %s98
      %p107 = scmp.eq.s32.totalorder %s22, 3
      %p108 = por %p106, %p107
      %p109 = scmp.ne.s32.totalorder %s98, %s99
      %p110 = scmp.eq.s32.totalorder %s22, 0
      %p111 = por %p109, %p110
      %p112 = scmp.ne.s32.totalorder %s98, %s99
      %p113 = scmp.eq.s32.totalorder %s23, 3
      %p114 = por %p112, %p113
      %p116 = scmp.ne.s32.totalorder %s99, %s115
      %p117 = scmp.eq.s32.totalorder %s23, 0
      %p118 = por %p116, %p117
      %p119 = scmp.le.s32.totalorder 1, %s17
      %p120 = scmp.lt.s32.totalorder %s17, 5
      %p121 = pnand %p119, %p120
      %p122 = pneg %p121
      // Predicated region
      $region9: #{tpu_custom_call.1} parent=5 // pred_check
        _
      $region10: #{tpu_custom_call.1} parent=5 // pred_check_branch
        %124 = sbr.rel (%p121) target = $region12
      $region11: #{tpu_custom_call.1} parent=5 // pred_region
        %s125 = ssub.s32 %s17, 1
        // Predicated region
        $region13: #{tpu_custom_call.1} parent=11 // pred_check
          %p126 = pneg %p38
        $region14: #{tpu_custom_call.1} parent=11 // pred_check_branch
          %128 = sbr.rel (%p126) target = $region16
        $region15: #{tpu_custom_call.1} parent=11 // pred_region
          %s130 = ssub.s32 16, 16
          %131 = vsyncadd [#allocation6], %s130
          %s133 = sshll.u32 %s0, 4
          %s134 = int_to_ptr.vmem [resolvable:$true] %s133
          %136 = dma.vmem_to_smem %s134, 16, [#allocation3], [#allocation6]
        $region16: #{tpu_custom_call.1} parent=11 // pred_fallthru
          _
        // Predicated region
        $region17: #{tpu_custom_call.1} parent=11 // pred_check
          %p137 = pneg %p59
        $region18: #{tpu_custom_call.1} parent=11 // pred_check_branch
          %139 = sbr.rel (%p137) target = $region20
        $region19: #{tpu_custom_call.1} parent=11 // pred_region
          _
        $region20: #{tpu_custom_call.1} parent=11 // pred_fallthru
          _
      $region12: #{tpu_custom_call.1} parent=5 // pred_fallthru
        _
      %p140 = scmp.lt.s32.totalorder %s17, 4
      // Predicated region
      $region21: #{tpu_custom_call.1} parent=5 // pred_check
        %p141 = pneg %p140
      $region22: #{tpu_custom_call.1} parent=5 // pred_check_branch
        %143 = sbr.rel (%p141) target = $region24
      $region23: #{tpu_custom_call.1} parent=5 // pred_region
        // Predicated region
        $region25: #{tpu_custom_call.1} parent=23 // pred_check
          %p144 = pneg %p79
        $region26: #{tpu_custom_call.1} parent=23 // pred_check_branch
          %146 = sbr.rel (%p144) target = $region28
        $region27: #{tpu_custom_call.1} parent=23 // pred_region
          %s147 = sand.u32 %s69, 1
          %s148 = scalar_lea.sflag [#allocation4], %s147
          %s149 = sand.u32 %s69, 1
          %s150 = smul.addr %s149, 16
          %s151 = scalar_lea.vmem [#allocation7], %s150
          %s152 = smul.u32 4, %s17
          %s154 = ssub.s32 256, 256
          %155 = vsyncadd %s148, %s154
          %s156 = smul.addr %s152, 64
          %s157 = scalar_lea.hbm %s2, %s156
          %s159 = sshll.u32 %s151, 4
          %s160 = int_to_ptr.vmem [resolvable:$true] %s159
          %162 = dma.hbm_to_vmem [thread:$0]  %s157, 256, %s160, %s148
        $region28: #{tpu_custom_call.1} parent=23 // pred_fallthru
          _
      $region24: #{tpu_custom_call.1} parent=5 // pred_fallthru
        _
      %p163 = scmp.le.s32.totalorder 1, %s17
      %p164 = scmp.lt.s32.totalorder %s17, 5
      %p165 = pnand %p163, %p164
      %p166 = pneg %p165
      // Predicated region
      $region29: #{tpu_custom_call.1} parent=5 // pred_check
        _
      $region30: #{tpu_custom_call.1} parent=5 // pred_check_branch
        %168 = sbr.rel (%p165) target = $region32
      $region31: #{tpu_custom_call.1} parent=5 // pred_region
        %s169 = ssub.s32 %s17, 1
        // Predicated region
        $region33: #{tpu_custom_call.1} parent=31 // pred_check
          %p170 = pneg %p38
        $region34: #{tpu_custom_call.1} parent=31 // pred_check_branch
          %172 = sbr.rel (%p170) target = $region36
        $region35: #{tpu_custom_call.1} parent=31 // pred_region
          %173 = dma.done [#allocation6], 16
        $region36: #{tpu_custom_call.1} parent=31 // pred_fallthru
          _
        %s174 = sand.u32 %s72, 1
        %s175 = scalar_lea.sflag [#allocation4], %s174
        %s176 = sand.u32 %s72, 1
        %s177 = smul.addr %s176, 16
        %s178 = scalar_lea.vmem [#allocation7], %s177
        // Predicated region
        $region37: #{tpu_custom_call.1} parent=31 // pred_check
          %p179 = pneg %p85
        $region38: #{tpu_custom_call.1} parent=31 // pred_check_branch
          %181 = sbr.rel (%p179) target = $region40
        $region39: #{tpu_custom_call.1} parent=31 // pred_region
          %182 = dma.done %s175, 256
        $region40: #{tpu_custom_call.1} parent=31 // pred_fallthru
          _
        %183 = sfence
        %p184 = pneg %p38
        %p185 = pneg %p35
        %p186 = pneg %p59
        %p187 = pneg %p56
        %s188 = sand.u32 %s72, 1
        %s189 = scalar_lea.sflag [#allocation4], %s188
        %s190 = sand.u32 %s72, 1
        %s191 = smul.addr %s190, 16
        %s192 = scalar_lea.vmem [#allocation7], %s191
        %p193 = pneg %p85
        %p194 = pneg %p82
        %p195 = pneg %p111
        %p196 = pneg %p108
        %s197 = sand.u32 %s98, 1
        %s198 = scalar_lea.sflag [#allocation5], %s197
        %s199 = sand.u32 %s98, 1
        %s200 = smul.addr %s199, 4
        %s201 = scalar_lea.vmem [#allocation8], %s200
        %s202 = smul.u32 4, %s22
        %s203 = smul.u32 4, %s22
        %v204 = vld [vmem:[%s178] ss:$4 sm:$0xf]
        %s205 = sld [smem:[#allocation3]]
        %v206 = vstv %s205
        %v207 = vmul.f32 %v204, %v206
        %s208 = sld [smem:[#allocation2]]
        %v209 = vstv %s208
        %v210 = vadd.f32 %v207, %v209
        %s211 = scalar_lea.vmem %s178, 1 [#allocation7]
        %v212 = vld [vmem:[%s211] ss:$4 sm:$0xf]
        %s213 = sld [smem:[#allocation3 + $0x1]]
        %v214 = vstv %s213
        %v215 = vmul.f32 %v212, %v214
        %v216 = vadd.f32 %v210, %v215
        %s217 = scalar_lea.vmem %s178, 2 [#allocation7]
        %v218 = vld [vmem:[%s217] ss:$4 sm:$0xf]
        %s219 = sld [smem:[#allocation3 + $0x2]]
        %v220 = vstv %s219
        %v221 = vmul.f32 %v218, %v220
        %v222 = vadd.f32 %v216, %v221
        %s223 = scalar_lea.vmem %s178, 3 [#allocation7]
        %v224 = vld [vmem:[%s223] ss:$4 sm:$0xf]
        %s225 = sld [smem:[#allocation3 + $0x3]]
        %v226 = vstv %s225
        %v227 = vmul.f32 %v224, %v226
        %v228 = vadd.f32 %v222, %v227
        %v229 = vlaneseq
        %vm230 = vcmp.ge.s32.totalorder %v229, 0
        %vm231 = vcmp.lt.s32.totalorder %v229, 512
        %vm232 = vmand %vm230, %vm231
        %233 = vst.msk [vmem:[%s201] sm:$0xf] %vm232, %v228
        %s234 = sand.u32 %s98, 1
        %s235 = scalar_lea.sflag [#allocation5], %s234
        %s236 = sand.u32 %s98, 1
        %s237 = smul.addr %s236, 4
        %s238 = scalar_lea.vmem [#allocation8], %s237
        // Predicated region
        $region41: #{tpu_custom_call.1} parent=31 // pred_check
          %p239 = pneg %p108
        $region42: #{tpu_custom_call.1} parent=31 // pred_check_branch
          %241 = sbr.rel (%p239) target = $region44
        $region43: #{tpu_custom_call.1} parent=31 // pred_region
          %s242 = smul.u32 4, %s22
          %s244 = ssub.s32 64, 64
          %245 = vsyncadd %s235, %s244
          %s246 = smul.addr %s242, 16
          %s247 = scalar_lea.hbm %s3, %s246
          %s249 = sshll.u32 %s238, 4
          %s250 = int_to_ptr.vmem [resolvable:$true] %s249
          %252 = dma.vmem_to_hbm [thread:$0]  %s250, 64, %s247, %s235
        $region44: #{tpu_custom_call.1} parent=31 // pred_fallthru
          _
      $region32: #{tpu_custom_call.1} parent=5 // pred_fallthru
        _
      %p253 = scmp.le.s32.totalorder 2, %s17
      // Predicated region
      $region45: #{tpu_custom_call.1} parent=5 // pred_check
        %p254 = pneg %p253
      $region46: #{tpu_custom_call.1} parent=5 // pred_check_branch
        %256 = sbr.rel (%p254) target = $region48
      $region47: #{tpu_custom_call.1} parent=5 // pred_region
        %s257 = ssub.s32 %s17, 2
        // Predicated region
        $region49: #{tpu_custom_call.1} parent=47 // pred_check
          %p258 = pneg %p114
        $region50: #{tpu_custom_call.1} parent=47 // pred_check_branch
          %260 = sbr.rel (%p258) target = $region52
        $region51: #{tpu_custom_call.1} parent=47 // pred_region
          %s261 = sand.u32 %s99, 1
          %s262 = scalar_lea.sflag [#allocation5], %s261
          %s263 = sand.u32 %s99, 1
          %s264 = smul.addr %s263, 4
          %s265 = scalar_lea.vmem [#allocation8], %s264
          %266 = dma.done %s262, 64
        $region52: #{tpu_custom_call.1} parent=47 // pred_fallthru
          _
      $region48: #{tpu_custom_call.1} parent=5 // pred_fallthru
        _
    $region6: #{tpu_custom_call.1} parent=1 // loop_footer
      %s21 = sadd.s32 1, %s17
    $region7: #{tpu_custom_call.1} parent=1 // loop_footer_branch
      %16 = sbr.rel target = $region3
    $region8: #{tpu_custom_call.1} parent=1 // loop_exit
      _
    %267 = vsyncpa [#allocation4], 1
    %s268 = scalar_lea.sflag [#allocation4], 1
    %269 = vsyncpa %s268, 1
    %270 = vsyncpa [#allocation5], 1
    %s271 = scalar_lea.sflag [#allocation5], 1
    %272 = vsyncpa %s271, 1
    %273 = vsyncpa [#allocation6], 1
    %s274 = scalar_lea.sflag [#allocation6], 1
    %275 = vsyncpa %s274, 1

</llo_original>
